<compile_context>
chip_gen: v7x
topology: tpu7x:2x2x1
jax: 0.10.0
libtpu: 0.0.40
codegen_flags: <defaults>
</compile_context>

<pallas_src>
import functools

import jax
import jax.numpy as jnp
import numpy as np
from jax import lax
from jax.experimental import pallas as pl
from jax.experimental.pallas import tpu as pltpu

_NEG_BIG = -1e30  # additive diag mask: exp(x - max) underflows to exactly 0


# --------------------------------------------------------------------------- #
# Kernel
# --------------------------------------------------------------------------- #
def _supcon_kernel(anchor_ref, contrast_ref, mask_ref, loss_ref,
                   m_sc, l_sc, s_sc, c_sc, *,
                   loss_scale, row_tile, col_tile, row_repeat, col_repeat):
    # anchor_ref:   [ta, D]  (compute dtype, 1/T already folded in)
    # contrast_ref: [tn, D]  (compute dtype)
    # mask_ref:     [mr, mc] (float32) small-mask stripe for this tile
    # loss_ref:     [1, 1, 1] per-anchor-tile partial sum of losses
    # m/l/s/c_sc:   [ta, 1] float32 running softmax statistics (carried over j)
    j = pl.program_id(1)

    @pl.when(j == 0)
    def _init():
        m_sc[...] = jnp.full_like(m_sc, -jnp.inf)
        l_sc[...] = jnp.zeros_like(l_sc)
        s_sc[...] = jnp.zeros_like(s_sc)
        c_sc[...] = jnp.zeros_like(c_sc)

    # [ta, tn] logits for this tile pair; contract last dims (no transpose).
    adc = lax.dot_general(anchor_ref[...], contrast_ref[...],
                          (((1,), (1,)), ((), ())),
                          preferred_element_type=jnp.float32)

    # Self-contrast (diagonal) entries that land inside this tile.
    row0 = pl.program_id(0) * row_tile
    col0 = j * col_tile
    rows = lax.broadcasted_iota(jnp.int32, (row_tile, col_tile), 0) + row0
    cols = lax.broadcasted_iota(jnp.int32, (row_tile, col_tile), 1) + col0
    diag = rows == cols

    # Positive mask for this tile: mask_small[(row0+r) % bsz, (col0+c) % bsz]
    # delivered by the BlockSpec; replicate only when the tile spans whole
    # copies of the batch (compile-time static).
    m = mask_ref[...]
    if col_repeat > 1:
        m = jnp.tile(m, (1, col_repeat))
    if row_repeat > 1:
        m = jnp.tile(m, (row_repeat, 1))
    pos = jnp.where(diag, 0.0, m)                 # positives, diagonal removed

    # Mask the diagonal once (finite large-negative) and reuse the masked
    # logits for the running max, the exp-sum and the positive-logit sum.
    adc = jnp.where(diag, _NEG_BIG, adc)

    # Online (flash-style) softmax statistics over the contrast axis.
    m_prev = m_sc[...]
    m_new = jnp.maximum(m_prev, jnp.max(adc, axis=1, keepdims=True))
    l_sc[...] = (l_sc[...] * jnp.exp(m_prev - m_new)
                 + jnp.sum(jnp.exp(adc - m_new), axis=1, keepdims=True))
    s_sc[...] = s_sc[...] + jnp.sum(pos * adc, axis=1, keepdims=True)
    c_sc[...] = c_sc[...] + jnp.sum(pos, axis=1, keepdims=True)
    m_sc[...] = m_new

    @pl.when(j == pl.num_programs(1) - 1)
    def _finalize():
        # mean_j pos*log_prob = s/c - (m + log l).  NOTE: like the PyTorch
        # reference, anchors with zero positives produce NaN (0/0).
        log_z = m_sc[...] + jnp.log(l_sc[...])
        mean_log_prob_pos = s_sc[...] / c_sc[...] - log_z          # [ta, 1]
        tile_sum = jnp.sum(loss_scale * mean_log_prob_pos,
                           axis=0, keepdims=True)                  # [1, 1]
        loss_ref[...] = tile_sum.reshape(1, 1, 1)


# --------------------------------------------------------------------------- #
# Tile selection (generation- and VMEM-aware)
# --------------------------------------------------------------------------- #
def _vmem_capacity_bytes():
    try:
        info = pltpu.get_tpu_info()
        cap = getattr(info, "vmem_capacity_bytes", None)
        if cap:
            return int(cap)
    except Exception:
        pass
    return 64 * 1024 * 1024   # conservative (v7x-sized) default


def _ta_valid(t, A, bsz, align):
    if A % t:
        return False
    if t != A and t % align:
        return False
    return (t % bsz == 0) or (bsz % t == 0)


def _tn_valid(t, N, bsz, align):
    if N % t:
        return False
    if t != N and t % align:
        return False
    if t % bsz == 0:
        return True
    # Column stripe of the small mask: its lane dim must be 128-aligned.
    return (bsz % t == 0) and (t % 128 == 0)


def _usage_bytes(ta, tn, D, bsz, bytes_c):
    mask_rows = bsz if ta % bsz == 0 else ta
    mask_cols = bsz if tn % bsz == 0 else tn
    anchors = 2 * ta * D * bytes_c              # double-buffered anchor tile
    contrast = 2 * tn * D * bytes_c             # double-buffered contrast tile
    maskb = 2 * mask_rows * max(mask_cols, 128) * 4
    temps = 6 * ta * tn * 4                     # live [ta, tn] f32 temporaries
    scratch = 4 * ta * 128 * 4                  # [ta,1] stats, lane-padded
    return anchors + contrast + maskb + temps + scratch + (1 << 20)


def _pick_tiles(A, N, D, bsz, bytes_c, align, budget,
                row_target=None, col_target=None):
    row_cap = min(A, row_target if row_target else 512)
    col_cap = min(N, col_target if col_target else 512)
    ta_opts = [t for t in range(row_cap, 0, -1) if _ta_valid(t, A, bsz, align)]
    tn_opts = [t for t in range(col_cap, 0, -1) if _tn_valid(t, N, bsz, align)]
    # TODO(synk): pad A/N to an aligned multiple (and mask padded anchors out of
    # the mean) instead of falling back to whole-dimension tiles for awkward
    # batch sizes; the fallback is correct but can be VMEM-hungry for huge A/N.
    if not ta_opts:
        ta_opts = [A]
    if not tn_opts:
        tn_opts = [N]
    pairs = sorted(((ta, tn) for ta in ta_opts for tn in tn_opts),
                   key=lambda p: (min(p), p[0] * p[1], p[0]), reverse=True)
    for ta, tn in pairs:
        if _usage_bytes(ta, tn, D, bsz, bytes_c) <= budget:
            return ta, tn
    return ta_opts[-1], tn_opts[-1]


# --------------------------------------------------------------------------- #
# Public wrapper (forward pass of ContrastiveLoss)
# --------------------------------------------------------------------------- #
def contrastive_loss(features, labels=None, mask=None, *,
                     temperature=0.07, contrast_mode='all',
                     base_temperature=0.07,
                     compute_dtype=jnp.bfloat16,
                     block_rows=None, block_cols=None):
    """JAX/Pallas port of ContrastiveLoss.forward (forward pass only)."""
    # TODO(synk): forward only -- no custom_vjp, so jax.grad is unsupported
    # (PyTorch's logits_max.detach() is a backward-only concern).
    if features.ndim < 3:
        raise ValueError('`features` needs to be [bsz, n_views, ...],'
                         'at least 3 dimensions are required')
    if features.ndim > 3:
        features = features.reshape(features.shape[0], features.shape[1], -1)

    bsz, n_views, dim = features.shape
    features = features.astype(jnp.float32)

    if labels is not None and mask is not None:
        raise ValueError('Cannot define both `labels` and `mask`')
    elif labels is None and mask is None:
        mask = jnp.eye(bsz, dtype=jnp.float32)
    elif labels is not None:
        labels = jnp.asarray(labels).reshape(-1, 1)
        if labels.shape[0] != bsz:
            raise ValueError('Num of labels does not match num of features')
        mask = (labels == labels.T).astype(jnp.float32)
    else:
        mask = jnp.asarray(mask).astype(jnp.float32)

    contrast_count = n_views
    # torch.cat(torch.unbind(features, dim=1), dim=0): view-major stacking.
    contrast_feature = jnp.transpose(features, (1, 0, 2)).reshape(
        n_views * bsz, dim)

    if contrast_mode == 'one':
        anchor_feature = features[:, 0]
        anchor_count = 1
    elif contrast_mode == 'all':
        anchor_feature = contrast_feature
        anchor_count = contrast_count
    else:
        raise ValueError('Unknown mode: {}'.format(contrast_mode))

    A = anchor_count * bsz
    N = contrast_count * bsz
    D = dim

    bytes_c = jnp.dtype(compute_dtype).itemsize
    sub_align = 16 if bytes_c == 2 else 8

    vmem_cap = _vmem_capacity_bytes()
    vmem_limit = max(int(min(vmem_cap, 128 * 1024 * 1024) * 3 // 4),
                     32 * 1024 * 1024)
    budget = int(vmem_limit * 4 // 5)

    ta, tn = _pick_tiles(A, N, D, bsz, bytes_c, sub_align, budget,
                         row_target=block_rows, col_target=block_cols)
    num_row_tiles = A // ta
    num_col_tiles = N // tn

    # Fold 1/T into the anchor operand in f32, then a single cast to the MXU
    # dtype (avoids a per-step scaling pass and a second bf16 rounding).
    anchor_mm = (anchor_feature * (1.0 / float(temperature))).astype(compute_dtype)
    contrast_mm = contrast_feature.astype(compute_dtype)

    # Small-mask striping: kernel tile (r, c) <- mask[(row0+r)%bsz, (col0+c)%bsz]
    if ta % bsz == 0:                         # tile spans whole batch copies
        mask_rows, row_repeat, row_period = bsz, ta // bsz, 1
    else:                                     # bsz % ta == 0: contiguous stripe
        mask_rows, row_repeat, row_period = ta, 1, bsz // ta
    if tn % bsz == 0:
        mask_cols, col_repeat, col_period = bsz, tn // bsz, 1
    else:                                     # bsz % tn == 0 (tn % 128 == 0)
        mask_cols, col_repeat, col_period = tn, 1, bsz // tn

    def mask_index(i, j, rp=row_period, cp=col_period):
        return (i % rp, j % cp)

    kernel = functools.partial(
        _supcon_kernel,
        loss_scale=-(float(temperature) / float(base_temperature)),
        row_tile=ta, col_tile=tn,
        row_repeat=row_repeat, col_repeat=col_repeat,
    )

    partial_sums = pl.pallas_call(
        kernel,
        out_shape=jax.ShapeDtypeStruct((num_row_tiles, 1, 1), jnp.float32),
        grid_spec=pltpu.PrefetchScalarGridSpec(
            num_scalar_prefetch=0,
            grid=(num_row_tiles, num_col_tiles),
            in_specs=[
                pl.BlockSpec((ta, D), lambda i, j: (i, 0)),        # anchor tile
                pl.BlockSpec((tn, D), lambda i, j: (j, 0)),        # contrast tile
                pl.BlockSpec((mask_rows, mask_cols), mask_index),  # mask stripe
            ],
            out_specs=pl.BlockSpec((1, 1, 1), lambda i, j: (i, 0, 0)),
            scratch_shapes=[pltpu.VMEM((ta, 1), jnp.float32)] * 4,
        ),
        compiler_params=pltpu.CompilerParams(
            dimension_semantics=("parallel", "arbitrary"),
            vmem_limit_bytes=int(vmem_limit),
        ),
    )(anchor_mm, contrast_mm, mask)

    # loss.view(anchor_count, bsz).mean() == sum(per-anchor losses) / A.
    return jnp.sum(partial_sums) / A


# --------------------------------------------------------------------------- #
# Pure-JAX reference (mirrors the PyTorch forward) and self-tests
# --------------------------------------------------------------------------- #
def _reference_loss(features, labels=None, mask=None, *, temperature=0.07,
                    contrast_mode='all', base_temperature=0.07):
    if features.ndim > 3:
        features = features.reshape(features.shape[0], features.shape[1], -1)
    bsz, n_views, dim = features.shape
    if labels is None and mask is None:
        mask = jnp.eye(bsz, dtype=jnp.float32)
    elif labels is not None:
        labels = jnp.asarray(labels).reshape(-1, 1)
        mask = (labels == labels.T).astype(jnp.float32)
    else:
        mask = jnp.asarray(mask).astype(jnp.float32)
    contrast_feature = jnp.transpose(features, (1, 0, 2)).reshape(-1, dim)
    if contrast_mode == 'one':
        anchor_feature, anchor_count = features[:, 0], 1
    else:
        anchor_feature, anchor_count = contrast_feature, n_views
    adc = jnp.matmul(anchor_feature, contrast_feature.T,
                     precision=jax.lax.Precision.HIGHEST) / temperature
    logits = adc - jnp.max(adc, axis=1, keepdims=True)
    mask = jnp.tile(mask, (anchor_count, n_views))
    A, N = logits.shape
    logits_mask = 1.0 - (jnp.arange(A)[:, None] == jnp.arange(N)[None, :]).astype(jnp.float32)
    mask = mask * logits_mask
    exp_logits = jnp.exp(logits) * logits_mask
    log_prob = logits - jnp.log(exp_logits.sum(1, keepdims=True))
    mean_log_prob_pos = (mask * log_prob).sum(1) / mask.sum(1)
    loss = -(temperature / base_temperature) * mean_log_prob_pos
    return loss.mean()


if __name__ == "__main__":
    key = jax.random.PRNGKey(0)
    k1, k2, k3 = jax.random.split(key, 3)

    # --- Case 1: default SupCon (identity mask); bsz=4, n_views=2, 8*4 -> D=32.
    feats = jax.random.normal(k1, (4, 2, 8, 4), dtype=jnp.float32)
    flat = feats.reshape(4, 2, -1)
    flat = flat / jnp.linalg.norm(flat, axis=-1, keepdims=True)
    feats = flat.reshape(4, 2, 8, 4)

    ref1 = _reference_loss(feats)
    out1 = jax.block_until_ready(contrastive_loss(feats, compute_dtype=jnp.float32))
    np.testing.assert_allclose(np.asarray(out1), np.asarray(ref1),
                               rtol=1e-4, atol=1e-4)

    # bf16 MXU operands (f32 accumulation) -- loose tolerance vs f32 reference.
    out1_bf16 = jax.block_until_ready(contrastive_loss(feats, compute_dtype=jnp.bfloat16))
    np.testing.assert_allclose(np.asarray(out1_bf16), np.asarray(ref1),
                               rtol=1e-1, atol=1e-1)

    # --- Case 2: labels + contrast_mode='one'.
    labels_small = jnp.array([0, 1, 0, 1], dtype=jnp.int32)
    ref2 = _reference_loss(feats, labels=labels_small, contrast_mode='one')
    out2 = jax.block_until_ready(
        contrastive_loss(feats, labels=labels_small, contrast_mode='one',
                         compute_dtype=jnp.float32))
    np.testing.assert_allclose(np.asarray(out2), np.asarray(ref2),
                               rtol=1e-4, atol=1e-4)

    # --- Case 3: multi-tile grid (4 anchor tiles x 2 contrast tiles) --
    # exercises the online-softmax carry, mask row striping, parallel axis.
    feats3 = jax.random.normal(k2, (16, 2, 128), dtype=jnp.float32)
    feats3 = feats3 / jnp.linalg.norm(feats3, axis=-1, keepdims=True)
    labels3 = jnp.arange(16, dtype=jnp.int32) % 4
    ref3 = _reference_loss(feats3, labels=labels3)
    out3 = jax.block_until_ready(
        contrastive_loss(feats3, labels=labels3, compute_dtype=jnp.float32,
                         block_rows=8, block_cols=16))
    np.testing.assert_allclose(np.asarray(out3), np.asarray(ref3),
                               rtol=1e-4, atol=1e-4)

    # --- Case 4: 128-wide contrast tiles smaller than bsz --
    # exercises the mask column striping (bsz % tn == 0, tn multiple of 128).
    feats4 = jax.random.normal(k3, (256, 1, 32), dtype=jnp.float32)
    feats4 = feats4 / jnp.linalg.norm(feats4, axis=-1, keepdims=True)
    labels4 = jnp.arange(256, dtype=jnp.int32) % 8
    ref4 = _reference_loss(feats4, labels=labels4)
    out4 = jax.block_until_ready(
        contrastive_loss(feats4, labels=labels4, compute_dtype=jnp.float32,
                         block_cols=128))
    np.testing.assert_allclose(np.asarray(out4), np.asarray(ref4),
                               rtol=1e-4, atol=1e-4)

    print("KERNEL_OK")
</pallas_src>

<mosaic_0001>
module attributes {stable_mosaic.version = 11 : i64} {
  func.func @_supcon_kernel(%arg0: i32, %arg1: i32, %arg2: memref<8x32xf32, #tpu.memory_space<vmem>>, %arg3: memref<8x32xf32, #tpu.memory_space<vmem>>, %arg4: memref<4x4xf32, #tpu.memory_space<vmem>>, %arg5: memref<1x1x1xf32, #tpu.memory_space<vmem>>, %arg6: memref<8x1xf32, #tpu.memory_space<vmem>>, %arg7: memref<8x1xf32, #tpu.memory_space<vmem>>, %arg8: memref<8x1xf32, #tpu.memory_space<vmem>>, %arg9: memref<8x1xf32, #tpu.memory_space<vmem>>) attributes {dimension_semantics = [#tpu.dimension_semantics<parallel>, #tpu.dimension_semantics<arbitrary>], iteration_bounds = array<i64: 1, 1>, scalar_prefetch = 0 : i64, scratch_operands = 4 : i64, tpu.core_type = #tpu.core_type<tc>, window_params = [{transform_indices = @transform_0, window_bounds = array<i64: 8, 32>}, {transform_indices = @transform_1, window_bounds = array<i64: 8, 32>}, {transform_indices = @transform_2, window_bounds = array<i64: 4, 4>}, {transform_indices = @transform_3, window_bounds = array<i64: 1, 1, 1>}]} {
    %c0_i32 = arith.constant 0 : i32
    %0 = arith.cmpi eq, %arg1, %c0_i32 : i32
    %1 = arith.extui %0 : i1 to i32
    %c0_i32_0 = arith.constant 0 : i32
    %2 = arith.cmpi ne, %1, %c0_i32_0 : i32
    scf.if %2 {
      %cst_31 = arith.constant 0xFF800000 : f32
      %52 = vector.broadcast %cst_31 : f32 to vector<8x1xf32>
      %c0_32 = arith.constant 0 : index
      %c0_33 = arith.constant 0 : index
      %53 = vector.load %arg6[%c0_32, %c0_33] : memref<8x1xf32, #tpu.memory_space<vmem>>, vector<8x1xf32>
      tpu.vector_store %arg6[%c0_32, %c0_33], %52 {strides = array<i32>} : memref<8x1xf32, #tpu.memory_space<vmem>>, vector<8x1xf32>,
      %cst_34 = arith.constant 0.000000e+00 : f32
      %54 = vector.broadcast %cst_34 : f32 to vector<8x1xf32>
      %c0_35 = arith.constant 0 : index
      %c0_36 = arith.constant 0 : index
      %55 = vector.load %arg7[%c0_35, %c0_36] : memref<8x1xf32, #tpu.memory_space<vmem>>, vector<8x1xf32>
      tpu.vector_store %arg7[%c0_35, %c0_36], %54 {strides = array<i32>} : memref<8x1xf32, #tpu.memory_space<vmem>>, vector<8x1xf32>,
      %cst_37 = arith.constant 0.000000e+00 : f32
      %56 = vector.broadcast %cst_37 : f32 to vector<8x1xf32>
      %c0_38 = arith.constant 0 : index
      %c0_39 = arith.constant 0 : index
      %57 = vector.load %arg8[%c0_38, %c0_39] : memref<8x1xf32, #tpu.memory_space<vmem>>, vector<8x1xf32>
      tpu.vector_store %arg8[%c0_38, %c0_39], %56 {strides = array<i32>} : memref<8x1xf32, #tpu.memory_space<vmem>>, vector<8x1xf32>,
      %cst_40 = arith.constant 0.000000e+00 : f32
      %58 = vector.broadcast %cst_40 : f32 to vector<8x1xf32>
      %c0_41 = arith.constant 0 : index
      %c0_42 = arith.constant 0 : index
      %59 = vector.load %arg9[%c0_41, %c0_42] : memref<8x1xf32, #tpu.memory_space<vmem>>, vector<8x1xf32>
      tpu.vector_store %arg9[%c0_41, %c0_42], %58 {strides = array<i32>} : memref<8x1xf32, #tpu.memory_space<vmem>>, vector<8x1xf32>,
    } else {
    }
    %c0 = arith.constant 0 : index
    %c0_1 = arith.constant 0 : index
    %3 = vector.load %arg2[%c0, %c0_1] : memref<8x32xf32, #tpu.memory_space<vmem>>, vector<8x32xf32>
    %c0_2 = arith.constant 0 : index
    %c0_3 = arith.constant 0 : index
    %4 = vector.load %arg3[%c0_2, %c0_3] : memref<8x32xf32, #tpu.memory_space<vmem>>, vector<8x32xf32>
    %cst = arith.constant dense<0.000000e+00> : vector<8x8xf32>
    %5 = tpu.matmul %3, %4, %cst {dimension_numbers = #tpu.dot_dimension_numbers<[1], [1], [0], [0], [0, 0, 1, 0], [], []>} : vector<8x32xf32>, vector<8x32xf32>, vector<8x8xf32> -> vector<8x8xf32>
    %c8_i32 = arith.constant 8 : i32
    %6 = arith.muli %arg0, %c8_i32 : i32
    %c8_i32_4 = arith.constant 8 : i32
    %7 = arith.muli %arg1, %c8_i32_4 : i32
    %8 = tpu.iota {dimensions = array<i32: 0>} : vector<8x8xi32>
    %9 = vector.broadcast %6 : i32 to vector<8x8xi32>
    %10 = arith.addi %8, %9 : vector<8x8xi32>
    %11 = tpu.iota {dimensions = array<i32: 1>} : vector<8x8xi32>
    %12 = vector.broadcast %7 : i32 to vector<8x8xi32>
    %13 = arith.addi %11, %12 : vector<8x8xi32>
    %14 = arith.cmpi eq, %10, %13 : vector<8x8xi32>
    %c0_5 = arith.constant 0 : index
    %c0_6 = arith.constant 0 : index
    %15 = vector.load %arg4[%c0_5, %c0_6] : memref<4x4xf32, #tpu.memory_space<vmem>>, vector<4x4xf32>
    %16 = tpu.concatenate %15, %15 in 1 : vector<4x4xf32>, vector<4x4xf32> -> vector<4x8xf32>
    %17 = tpu.concatenate %16, %16 in 0 : vector<4x8xf32>, vector<4x8xf32> -> vector<8x8xf32>
    %cst_7 = arith.constant 0.000000e+00 : f32
    %18 = vector.broadcast %cst_7 : f32 to vector<8x8xf32>
    %19 = arith.select %14, %18, %17 : vector<8x8xi1>, vector<8x8xf32>
    %cst_8 = arith.constant -1.000000e+30 : f32
    %20 = vector.broadcast %cst_8 : f32 to vector<8x8xf32>
    %21 = arith.select %14, %20, %5 : vector<8x8xi1>, vector<8x8xf32>
    %c0_9 = arith.constant 0 : index
    %c0_10 = arith.constant 0 : index
    %22 = vector.load %arg6[%c0_9, %c0_10] : memref<8x1xf32, #tpu.memory_space<vmem>>, vector<8x1xf32>
    %cst_11 = arith.constant dense<0xFF800000> : vector<8xf32>
    %23 = vector.multi_reduction <maximumf>, %21, %cst_11 [1] : vector<8x8xf32> to vector<8xf32>
    %24 = vector.shape_cast %23 : vector<8xf32> to vector<8x1xf32>
    %25 = arith.maximumf %22, %24 : vector<8x1xf32>
    %c0_12 = arith.constant 0 : index
    %c0_13 = arith.constant 0 : index
    %26 = vector.load %arg7[%c0_12, %c0_13] : memref<8x1xf32, #tpu.memory_space<vmem>>, vector<8x1xf32>
    %27 = arith.subf %22, %25 : vector<8x1xf32>
    %28 = math.exp %27 : vector<8x1xf32>
    %29 = arith.mulf %26, %28 : vector<8x1xf32>
    %30 = vector.broadcast %25 : vector<8x1xf32> to vector<8x8xf32>
    %31 = arith.subf %21, %30 : vector<8x8xf32>
    %32 = math.exp %31 : vector<8x8xf32>
    %cst_14 = arith.constant dense<0.000000e+00> : vector<8xf32>
    %33 = vector.multi_reduction <add>, %32, %cst_14 [1] : vector<8x8xf32> to vector<8xf32>
    %34 = vector.shape_cast %33 : vector<8xf32> to vector<8x1xf32>
    %35 = arith.addf %29, %34 : vector<8x1xf32>
    %c0_15 = arith.constant 0 : index
    %c0_16 = arith.constant 0 : index
    %36 = vector.load %arg7[%c0_15, %c0_16] : memref<8x1xf32, #tpu.memory_space<vmem>>, vector<8x1xf32>
    tpu.vector_store %arg7[%c0_15, %c0_16], %35 {strides = array<i32>} : memref<8x1xf32, #tpu.memory_space<vmem>>, vector<8x1xf32>,
    %c0_17 = arith.constant 0 : index
    %c0_18 = arith.constant 0 : index
    %37 = vector.load %arg8[%c0_17, %c0_18] : memref<8x1xf32, #tpu.memory_space<vmem>>, vector<8x1xf32>
    %38 = arith.mulf %19, %21 : vector<8x8xf32>
    %cst_19 = arith.constant dense<0.000000e+00> : vector<8xf32>
    %39 = vector.multi_reduction <add>, %38, %cst_19 [1] : vector<8x8xf32> to vector<8xf32>
    %40 = vector.shape_cast %39 : vector<8xf32> to vector<8x1xf32>
    %41 = arith.addf %37, %40 : vector<8x1xf32>
    %c0_20 = arith.constant 0 : index
    %c0_21 = arith.constant 0 : index
    %42 = vector.load %arg8[%c0_20, %c0_21] : memref<8x1xf32, #tpu.memory_space<vmem>>, vector<8x1xf32>
    tpu.vector_store %arg8[%c0_20, %c0_21], %41 {strides = array<i32>} : memref<8x1xf32, #tpu.memory_space<vmem>>, vector<8x1xf32>,
    %c0_22 = arith.constant 0 : index
    %c0_23 = arith.constant 0 : index
    %43 = vector.load %arg9[%c0_22, %c0_23] : memref<8x1xf32, #tpu.memory_space<vmem>>, vector<8x1xf32>
    %cst_24 = arith.constant dense<0.000000e+00> : vector<8xf32>
    %44 = vector.multi_reduction <add>, %19, %cst_24 [1] : vector<8x8xf32> to vector<8xf32>
    %45 = vector.shape_cast %44 : vector<8xf32> to vector<8x1xf32>
    %46 = arith.addf %43, %45 : vector<8x1xf32>
    %c0_25 = arith.constant 0 : index
    %c0_26 = arith.constant 0 : index
    %47 = vector.load %arg9[%c0_25, %c0_26] : memref<8x1xf32, #tpu.memory_space<vmem>>, vector<8x1xf32>
    tpu.vector_store %arg9[%c0_25, %c0_26], %46 {strides = array<i32>} : memref<8x1xf32, #tpu.memory_space<vmem>>, vector<8x1xf32>,
    %c0_27 = arith.constant 0 : index
    %c0_28 = arith.constant 0 : index
    %48 = vector.load %arg6[%c0_27, %c0_28] : memref<8x1xf32, #tpu.memory_space<vmem>>, vector<8x1xf32>
    tpu.vector_store %arg6[%c0_27, %c0_28], %25 {strides = array<i32>} : memref<8x1xf32, #tpu.memory_space<vmem>>, vector<8x1xf32>,
    %c0_i32_29 = arith.constant 0 : i32
    %49 = arith.cmpi eq, %arg1, %c0_i32_29 : i32
    %50 = arith.extui %49 : i1 to i32
    %c0_i32_30 = arith.constant 0 : i32
    %51 = arith.cmpi ne, %50, %c0_i32_30 : i32
    scf.if %51 {
      %c0_31 = arith.constant 0 : index
      %c0_32 = arith.constant 0 : index
      %52 = vector.load %arg6[%c0_31, %c0_32] : memref<8x1xf32, #tpu.memory_space<vmem>>, vector<8x1xf32>
      %c0_33 = arith.constant 0 : index
      %c0_34 = arith.constant 0 : index
      %53 = vector.load %arg7[%c0_33, %c0_34] : memref<8x1xf32, #tpu.memory_space<vmem>>, vector<8x1xf32>
      %54 = math.log %53 : vector<8x1xf32>
      %55 = arith.addf %52, %54 : vector<8x1xf32>
      %c0_35 = arith.constant 0 : index
      %c0_36 = arith.constant 0 : index
      %56 = vector.load %arg8[%c0_35, %c0_36] : memref<8x1xf32, #tpu.memory_space<vmem>>, vector<8x1xf32>
      %c0_37 = arith.constant 0 : index
      %c0_38 = arith.constant 0 : index
      %57 = vector.load %arg9[%c0_37, %c0_38] : memref<8x1xf32, #tpu.memory_space<vmem>>, vector<8x1xf32>
      %58 = arith.divf %56, %57 : vector<8x1xf32>
      %59 = arith.subf %58, %55 : vector<8x1xf32>
      %cst_39 = arith.constant -1.000000e+00 : f32
      %60 = vector.broadcast %cst_39 : f32 to vector<8x1xf32>
      %61 = arith.mulf %60, %59 : vector<8x1xf32>
      %cst_40 = arith.constant dense<0.000000e+00> : vector<1xf32>
      %62 = vector.multi_reduction <add>, %61, %cst_40 [0] : vector<8x1xf32> to vector<1xf32>
      %63 = vector.shape_cast %62 : vector<1xf32> to vector<1x1xf32>
      %64 = vector.shape_cast %63 : vector<1x1xf32> to vector<1x1x1xf32>
      %c0_41 = arith.constant 0 : index
      %c0_42 = arith.constant 0 : index
      %c0_43 = arith.constant 0 : index
      %65 = vector.load %arg5[%c0_41, %c0_42, %c0_43] : memref<1x1x1xf32, #tpu.memory_space<vmem>>, vector<1x1x1xf32>
      tpu.vector_store %arg5[%c0_41, %c0_42, %c0_43], %64 {strides = array<i32>} : memref<1x1x1xf32, #tpu.memory_space<vmem>>, vector<1x1x1xf32>,
    } else {
    }
    return
  }
  func.func @transform_0(%arg0: i32, %arg1: i32) -> (i32, i32) {
    %c0_i32 = arith.constant 0 : i32
    %c0_i32_0 = arith.constant 0 : i32
    return %arg0, %c0_i32 : i32, i32
  }
  func.func @transform_1(%arg0: i32, %arg1: i32) -> (i32, i32) {
    %c0_i32 = arith.constant 0 : i32
    %c0_i32_0 = arith.constant 0 : i32
    return %arg1, %c0_i32 : i32, i32
  }
  func.func @transform_2(%arg0: i32, %arg1: i32) -> (i32, i32) {
    %c1_i32 = arith.constant 1 : i32
    %c0_i32 = arith.constant 0 : i32
    %0 = arith.cmpi eq, %c1_i32, %c0_i32 : i32
    %c1_i32_0 = arith.constant 1 : i32
    %1 = arith.select %0, %c1_i32_0, %c1_i32 : i32
    %2 = arith.remsi %arg0, %1 : i32
    %c0_i32_1 = arith.constant 0 : i32
    %3 = arith.cmpi ne, %2, %c0_i32_1 : i32
    %c0_i32_2 = arith.constant 0 : i32
    %4 = arith.cmpi slt, %2, %c0_i32_2 : i32
    %c0_i32_3 = arith.constant 0 : i32
    %5 = arith.cmpi slt, %1, %c0_i32_3 : i32
    %6 = arith.xori %4, %5 : i1
    %7 = arith.andi %6, %3 : i1
    %8 = arith.addi %2, %1 : i32
    %9 = arith.select %7, %8, %2 : i32
    %c1_i32_4 = arith.constant 1 : i32
    %c0_i32_5 = arith.constant 0 : i32
    %10 = arith.cmpi eq, %c1_i32_4, %c0_i32_5 : i32
    %c1_i32_6 = arith.constant 1 : i32
    %11 = arith.select %10, %c1_i32_6, %c1_i32_4 : i32
    %12 = arith.remsi %arg1, %11 : i32
    %c0_i32_7 = arith.constant 0 : i32
    %13 = arith.cmpi ne, %12, %c0_i32_7 : i32
    %c0_i32_8 = arith.constant 0 : i32
    %14 = arith.cmpi slt, %12, %c0_i32_8 : i32
    %c0_i32_9 = arith.constant 0 : i32
    %15 = arith.cmpi slt, %11, %c0_i32_9 : i32
    %16 = arith.xori %14, %15 : i1
    %17 = arith.andi %16, %13 : i1
    %18 = arith.addi %12, %11 : i32
    %19 = arith.select %17, %18, %12 : i32
    %c0_i32_10 = arith.constant 0 : i32
    return %9, %19 : i32, i32
  }
  func.func @transform_3(%arg0: i32, %arg1: i32) -> (i32, i32, i32) {
    %c0_i32 = arith.constant 0 : i32
    %c0_i32_0 = arith.constant 0 : i32
    %c0_i32_1 = arith.constant 0 : i32
    return %arg0, %c0_i32, %c0_i32_0 : i32, i32, i32
  }
}

</mosaic_0001>

<llo_original>
// kernel: tpu_custom_call.1
$region0: #{tpu_custom_call.1}
  #allocation0 [shape = 'u32[]', space=smem, size = 0x4, offset = 0x4, fixed_abs, tag = 'smem constant byte address 0x4 - core index']
  #allocation1 [shape = 'u32[144,128]{1,0:T(1,128)}', space=vmem, size = 0x12000, scoped, tag = 'internal scratch']
  #allocation2 [shape = 'f32[8,1]{1,0:T(8,128)}', space=vmem, size = 0x1000, scoped, tag = 'scratch operand']
  #allocation3 [shape = 'f32[8,1]{1,0:T(8,128)}', space=vmem, size = 0x1000, scoped, tag = 'scratch operand']
  #allocation4 [shape = 'f32[8,1]{1,0:T(8,128)}', space=vmem, size = 0x1000, scoped, tag = 'scratch operand']
  #allocation5 [shape = 'f32[8,1]{1,0:T(8,128)}', space=vmem, size = 0x1000, scoped, tag = 'scratch operand']
  %s0 = inlined_call_operand.hbm [shape: f32[8,32], index: 0, kind: input, shape index: {}]
  %s1 = inlined_call_operand.hbm [shape: f32[8,32], index: 1, kind: input, shape index: {}]
  %s2 = inlined_call_operand.vmem [shape: f32[4,4], index: 2, kind: input, shape index: {}]
  %s3 = inlined_call_operand.hbm [shape: f32[1,1,1], index: 3, kind: output, shape index: {}]
  %s4 = sld [smem:[#allocation0]]
  $region38: #{tpu_custom_call.1} parent=0
    _
  %s6 = ssub.s32 1, %s4
  %s7 = scalar_select 0, %s6, %s4
  $region1: #{tpu_custom_call.1} parent=0
    #allocation6 [shape = 'u8[4096]{0}', space=vmem, size = 0x1000, scoped, tag = 'input window, operand 0, single buffered']
    #allocation7 [shape = 's32[1]{0}', space=sflag, size = 0x4, scoped, tag = 'scoped memory for tpu_custom_call.1']
    #allocation8 [shape = 's32[1]{0}', space=sflag, size = 0x4, scoped, tag = 'scoped memory for tpu_custom_call.1']
    #allocation9 [shape = 'u8[4096]{0}', space=vmem, size = 0x1000, scoped, tag = 'input window, operand 1, single buffered']
    #allocation10 [shape = 's32[1]{0}', space=sflag, size = 0x4, scoped, tag = 'scoped memory for tpu_custom_call.1']
    #allocation11 [shape = 'u8[512]{0}', space=vmem, size = 0x400, scoped, tag = 'output window, operand 0, single buffered']
    %8 = vsyncpa [#allocation7], 0
    %9 = vsyncpa [#allocation10], 0
    %10 = vsyncpa [#allocation8], 0
    // Predicated region
    $region2: #{tpu_custom_call.1} parent=1 // pred_check
      _
    $region3: #{tpu_custom_call.1} parent=1 // pred_check_branch
      %12 = sbr.rel (0) target = $region5
    $region4: #{tpu_custom_call.1} parent=1 // pred_region
      %s14 = ssub.s32 128, 128
      %15 = vsyncadd [#allocation7], %s14
      %s17 = sshll.u32 [#allocation6], 4
      %s18 = int_to_ptr.vmem [resolvable:$true] %s17
      %20 = dma.hbm_to_vmem [thread:$0]  %s0, 128, %s18, [#allocation7]
    $region5: #{tpu_custom_call.1} parent=1 // pred_fallthru
      _
    // Predicated region
    $region6: #{tpu_custom_call.1} parent=1 // pred_check
      _
    $region7: #{tpu_custom_call.1} parent=1 // pred_check_branch
      %22 = sbr.rel (0) target = $region9
    $region8: #{tpu_custom_call.1} parent=1 // pred_region
      %s24 = ssub.s32 128, 128
      %25 = vsyncadd [#allocation10], %s24
      %s27 = sshll.u32 [#allocation9], 4
      %s28 = int_to_ptr.vmem [resolvable:$true] %s27
      %30 = dma.hbm_to_vmem [thread:$0]  %s1, 128, %s28, [#allocation10]
    $region9: #{tpu_custom_call.1} parent=1 // pred_fallthru
      _
    // Predicated region
    $region10: #{tpu_custom_call.1} parent=1 // pred_check
      _
    $region11: #{tpu_custom_call.1} parent=1 // pred_check_branch
      %32 = sbr.rel (0) target = $region13
    $region12: #{tpu_custom_call.1} parent=1 // pred_region
      _
    $region13: #{tpu_custom_call.1} parent=1 // pred_fallthru
      _
    // Predicated region
    $region14: #{tpu_custom_call.1} parent=1 // pred_check
      _
    $region15: #{tpu_custom_call.1} parent=1 // pred_check_branch
      %34 = sbr.rel (0) target = $region17
    $region16: #{tpu_custom_call.1} parent=1 // pred_region
      %35 = dma.done [#allocation7], 128
    $region17: #{tpu_custom_call.1} parent=1 // pred_fallthru
      _
    // Predicated region
    $region18: #{tpu_custom_call.1} parent=1 // pred_check
      _
    $region19: #{tpu_custom_call.1} parent=1 // pred_check_branch
      %37 = sbr.rel (0) target = $region21
    $region20: #{tpu_custom_call.1} parent=1 // pred_region
      %38 = dma.done [#allocation10], 128
    $region21: #{tpu_custom_call.1} parent=1 // pred_fallthru
      _
    %p39 = scmp.eq.s32.totalorder 0, 0
    // Predicated region
    $region22: #{tpu_custom_call.1} parent=1 // pred_check
      %p40 = pneg %p39
    $region23: #{tpu_custom_call.1} parent=1 // pred_check_branch
      %42 = sbr.rel (%p40) target = $region25
    $region24: #{tpu_custom_call.1} parent=1 // pred_region
      %vm43 = vcmask 7168
      %44 = vst.msk [vmem:[#allocation2] sm:$0xff] %vm43, -inf
      %45 = vst.msk [vmem:[#allocation3] sm:$0xff] %vm43, 0.0
      %46 = vst.msk [vmem:[#allocation4] sm:$0xff] %vm43, 0.0
      %47 = vst.msk [vmem:[#allocation5] sm:$0xff] %vm43, 0.0
    $region25: #{tpu_custom_call.1} parent=1 // pred_fallthru
      _
    %v48 = vld [vmem:[#allocation6] sm:$0xff]
    %v49 = vld [vmem:[#allocation9] sm:$0xff]
    %vm50 = vcmask 261120
    %v52 = vsel %vm50, %v48, 0
    %v55 = vsel %vm50, %v49, 0
    %57 = vmatprep.subr.mxu0 0.0
    %58 = vmatpush1.xpose.msra.mxu0 %v55
    %59 = vmatprep.subr.mxu0 0.0
    %60 = vmatpush1.xpose.msra.mxu0 0.0
    %61 = vmatprep.subr.mxu0 0.0
    %62 = vmatpush1.xpose.msra.mxu0 0.0
    %63 = vmatprep.subr.mxu0 0.0
    %64 = vmatpush1.xpose.msra.mxu0 0.0
    %65 = vmatprep.subr.mxu0 0.0
    %66 = vmatpush1.xpose.msra.mxu0 0.0
    %67 = vmatprep.subr.mxu0 0.0
    %68 = vmatpush1.xpose.msra.mxu0 0.0
    %69 = vmatprep.subr.mxu0 0.0
    %70 = vmatpush1.xpose.msra.mxu0 0.0
    %71 = vmatprep.subr.mxu0 0.0
    %72 = vmatpush1.xpose.msra.mxu0 0.0
    %73 = vmatprep.subr.mxu0 0.0
    %74 = vmatpush1.xpose.msra.mxu0 0.0
    %75 = vmatprep.subr.mxu0 0.0
    %76 = vmatpush1.xpose.msra.mxu0 0.0
    %77 = vmatprep.subr.mxu0 0.0
    %78 = vmatpush1.xpose.msra.mxu0 0.0
    %79 = vmatprep.subr.mxu0 0.0
    %80 = vmatpush1.xpose.msra.mxu0 0.0
    %81 = vmatprep.subr.mxu0 0.0
    %82 = vmatpush1.xpose.msra.mxu0 0.0
    %83 = vmatprep.subr.mxu0 0.0
    %84 = vmatpush1.xpose.msra.mxu0 0.0
    %85 = vmatprep.subr.mxu0 0.0
    %86 = vmatpush1.xpose.msra.mxu0 0.0
    %87 = vmatprep.subr.mxu0 0.0
    %88 = vmatpush1.xpose.msra.mxu0 0.0
    %89 = vmatprep.subr.mxu0 0.0
    %90 = vmatpush1.xpose.msra.mxu0 0.0
    %91 = vmatprep.subr.mxu0 0.0
    %92 = vmatpush1.xpose.msra.mxu0 0.0
    %93 = vmatprep.subr.mxu0 0.0
    %94 = vmatpush1.xpose.msra.mxu0 0.0
    %95 = vmatprep.subr.mxu0 0.0
    %96 = vmatpush1.xpose.msra.mxu0 0.0
    %97 = vmatprep.subr.mxu0 0.0
    %98 = vmatpush1.xpose.msra.mxu0 0.0
    %99 = vmatprep.subr.mxu0 0.0
    %100 = vmatpush1.xpose.msra.mxu0 0.0
    %101 = vmatprep.subr.mxu0 0.0
    %102 = vmatpush1.xpose.msra.mxu0 0.0
    %103 = vmatprep.subr.mxu0 0.0
    %104 = vmatpush1.xpose.msra.mxu0 0.0
    %105 = vmatprep.subr.mxu0 0.0
    %106 = vmatpush1.xpose.msra.mxu0 0.0
    %107 = vmatprep.subr.mxu0 0.0
    %108 = vmatpush1.xpose.msra.mxu0 0.0
    %109 = vmatprep.subr.mxu0 0.0
    %110 = vmatpush1.xpose.msra.mxu0 0.0
    %111 = vmatprep.subr.mxu0 0.0
    %112 = vmatpush1.xpose.msra.mxu0 0.0
    %113 = vmatprep.subr.mxu0 0.0
    %114 = vmatpush1.xpose.msra.mxu0 0.0
    %115 = vmatprep.subr.mxu0 0.0
    %116 = vmatpush1.xpose.msra.mxu0 0.0
    %117 = vmatprep.subr.mxu0 0.0
    %118 = vmatpush1.xpose.msra.mxu0 0.0
    %119 = vmatprep.subr.mxu0 0.0
    %120 = vmatpush1.xpose.msra.mxu0 0.0
    %121 = vmatprep.mubr.f32.mxu0 0.0
    %122 = vmatmul.mubr.f32.gmra.mrb[0].mxu0 %v52
    %v123 = vpop.f32.mrb[0].mxu0
    %v124 = vadd.f32 0.0, %v123
    %v125 = vpop.f32.mrb[0].mxu0
    %126 = vdwg.mxu0
    %s127 = smul.u32 0, 8
    %s128 = smul.u32 0, 8
    %v129 = vlaneseq
    %v130 = vshrl.u32 %v129, 7
    %v131 = vstv %s127
    %v132 = vadd.s32 %v130, %v131
    %v133 = vlaneseq
    %v134 = vand.u32 %v133, 127
    %v135 = vstv %s128
    %v136 = vadd.s32 %v134, %v135
    %vm137 = vcmp.eq.s32.totalorder %v132, %v136
    %v138 = vld [vmem:[%s2] sm:$0xf]
    %140 = vrot.lane.b32.xlu0 %v138, 4
    %v141 = vpop.permute.xlu0 %140
    %vm143 = vcmask 31744
    %v144 = vsel %vm143, %v138, %v141
    %v146 = vrot.slane %v144, 4
    %vm148 = vcmask 1043456
    %v149 = vsel %vm148, %v144, %v146
    %v150 = vsel %vm137, 0.0, %v149
    %v151 = vsel %vm137, -1e+30, %v124
    %v152 = vld [vmem:[#allocation2] sm:$0xff]
    %vm153 = vcmask 64512
    %v154 = vsel %vm153, %v151, -inf
    %155 = vmax.xlane.f32.xlu0 %v154
    %v156 = vpop.xlane.xlu0 %155
    %v157 = vmax.f32 %v152, %v156
    %v158 = vld [vmem:[#allocation3] sm:$0xff]
    %v159 = vsub.f32 %v152, %v157
    %v160 = vmul.f32 %v159, 1.442695
    %v161 = vpow.pop %v160
    %v162 = vmul.f32 %v158, %v161
    %164 = vset.pattern.permute.xlu0 0
    %165 = vperm.xlu0 %164, %v157
    %v166 = vpop.permute.xlu0 %165
    %v168 = vsub.f32 %v151, %v166
    %v169 = vmul.f32 %v168, 1.442695
    %v170 = vpow.pop %v169
    %v171 = vsel %vm153, %v170, 0.0
    %172 = vadd.xlane.f32.xlu0 %v171
    %v173 = vpop.xlane.xlu0 %172
    %v174 = vadd.f32 %v162, %v173
    %vm175 = vcmask 7168
    %176 = vst.msk [vmem:[#allocation3] sm:$0xff] %vm175, %v174
    %v177 = vld [vmem:[#allocation4] sm:$0xff]
    %v178 = vmul.f32 %v150, %v151
    %v179 = vsel %vm153, %v178, 0.0
    %180 = vadd.xlane.f32.xlu0 %v179
    %v181 = vpop.xlane.xlu0 %180
    %v182 = vadd.f32 %v177, %v181
    %183 = vst.msk [vmem:[#allocation4] sm:$0xff] %vm175, %v182
    %v184 = vld [vmem:[#allocation5] sm:$0xff]
    %v185 = vsel %vm153, %v150, 0.0
    %186 = vadd.xlane.f32.xlu0 %v185
    %v187 = vpop.xlane.xlu0 %186
    %v188 = vadd.f32 %v184, %v187
    %189 = vst.msk [vmem:[#allocation5] sm:$0xff] %vm175, %v188
    %190 = vst.msk [vmem:[#allocation2] sm:$0xff] %vm175, %v157
    // Predicated region
    $region26: #{tpu_custom_call.1} parent=1 // pred_check
      %p191 = pneg %p39
    $region27: #{tpu_custom_call.1} parent=1 // pred_check_branch
      %193 = sbr.rel (%p191) target = $region29
    $region28: #{tpu_custom_call.1} parent=1 // pred_region
      %v194 = vld [vmem:[#allocation2] sm:$0xff]
      %v195 = vld [vmem:[#allocation3] sm:$0xff]
      %v196 = vlog2.pop %v195
      %v197 = vmul.f32 %v196, 0.6931472
      %v198 = vadd.f32 %v194, %v197
      %v199 = vld [vmem:[#allocation4] sm:$0xff]
      %v200 = vld [vmem:[#allocation5] sm:$0xff]
      %v201 = vrcp.pop %v200
      %v202 = vmul.f32 %v199, %v201
      %v203 = vsub.f32 %v202, %v198
      %v204 = vmul.f32 %v203, -1.0
      %v205 = vsel %vm175, %v204, 0.0
      %v206 = vrot.slane %v205, 4
      %v207 = vadd.f32 %v205, %v206
      %v208 = vrot.slane %v207, 2
      %v209 = vadd.f32 %v207, %v208
      %v210 = vrot.slane %v209, 1
      %v211 = vadd.f32 %v209, %v210
      %vm212 = vcmask 0
      %213 = vst.msk [vmem:[#allocation11] sm:$0x1] %vm212, %v211
    $region29: #{tpu_custom_call.1} parent=1 // pred_fallthru
      _
    // Predicated region
    $region30: #{tpu_custom_call.1} parent=1 // pred_check
      _
    $region31: #{tpu_custom_call.1} parent=1 // pred_check_branch
      %215 = sbr.rel (0) target = $region33
    $region32: #{tpu_custom_call.1} parent=1 // pred_region
      %s217 = ssub.s32 16, 16
      %218 = vsyncadd [#allocation8], %s217
      %s220 = sshll.u32 [#allocation11], 4
      %s221 = int_to_ptr.vmem [resolvable:$true] %s220
      %223 = dma.vmem_to_hbm [thread:$0]  %s221, 16, %s3, [#allocation8]
    $region33: #{tpu_custom_call.1} parent=1 // pred_fallthru
      _
    // Predicated region
    $region34: #{tpu_custom_call.1} parent=1 // pred_check
      _
    $region35: #{tpu_custom_call.1} parent=1 // pred_check_branch
      %225 = sbr.rel (0) target = $region37
    $region36: #{tpu_custom_call.1} parent=1 // pred_region
      %226 = dma.done [#allocation8], 16
    $region37: #{tpu_custom_call.1} parent=1 // pred_fallthru
      _
    %227 = vsyncpa [#allocation7], 1
    %228 = vsyncpa [#allocation10], 1
    %229 = vsyncpa [#allocation8], 1

</llo_original>
